<compile_context>
chip_gen: v6e
topology: v6e:2x2x1
jax: 0.10.0
libtpu: 0.0.40
codegen_flags: <defaults>
</compile_context>

<pallas_src>
import jax
import jax.numpy as jnp
from jax import lax
from jax.experimental import pallas as pl
from jax.experimental.pallas import tpu as pltpu


def _epic_kernel(x_ref, w_ref, b_ref, o_ref):
    """One row tile of s = log1p(softplus(x @ w^T + b)).

    x_ref: (tm, Dp)     VMEM  -- row tile of (possibly lane-packed) inputs
    w_ref: (W, Dp)      VMEM  -- resident weight (W=1 plain, W=k block-diag packed)
    b_ref: (1,)         SMEM  -- bias scalar
    o_ref: (1, W, tm)   VMEM  -- lane-dense output tile
    """
    # (W, Dp) x (tm, Dp) contracted on Dp -> (W, tm): lane-dense MXU result, f32 acc.
    # TODO(synk): verify in a bundle dump that Mosaic streams the big x tile (not the
    # tiny weight) through the MXU; if vmatmul/weight-load cycles ever rival the DMA,
    # switch to a VPU formulation (x * w elementwise, reduce over Dp).
    z = lax.dot_general(
        w_ref[...], x_ref[...],
        dimension_numbers=(((1,), (1,)), ((), ())),
        preferred_element_type=jnp.float32,
    )
    z = z + b_ref[0]
    # Numerically stable softplus: log(1 + exp(z)) = max(z, 0) + log1p(exp(-|z|))
    sp = jnp.maximum(z, 0.0) + jnp.log1p(jnp.exp(-jnp.abs(z)))
    o_ref[0] = jnp.log1p(sp).astype(o_ref.dtype)


def _round_up(a, b):
    return (a + b - 1) // b * b


def epic_term_importance(x, weight, bias, *, tm=None, num_buffers=2):
    """x: (..., D); weight: (1, D) torch nn.Linear layout; bias: (1,). Returns (..., 1).

    `tm` is an explicit row-tile override; by default the tile fills the per-chip
    VMEM budget. `num_buffers=3` enables triple buffering of the x stream (v7x).
    """
    orig_shape = x.shape
    D = orig_shape[-1]
    x2 = x.reshape(-1, D)
    N = x2.shape[0]
    itemsize = x2.dtype.itemsize

    # NOTE: weight is cast to x.dtype (f32 weights under bf16 activations quantize
    # slightly; accumulation stays f32 so the effect is minor).
    w = weight.reshape(1, D).astype(x2.dtype)
    b = bias.reshape(1).astype(jnp.float32)

    # ---- Narrow-feature lane packing (D << 128): pack k rows per 128-lane row.
    k = 1
    if D < 128 and 128 % D == 0:
        k_try = 128 // D
        if N >= k_try and N % k_try == 0:
            k = k_try
    if k > 1:
        Dp = k * D
        xk = x2.reshape(N // k, Dp)                       # contiguous reshape: free in HBM
        eye = jnp.eye(k, dtype=w.dtype)
        wk = (eye[:, :, None] * w.reshape(1, 1, D)).reshape(k, Dp)   # block-diagonal weight
    else:
        Dp = D
        xk = x2
        wk = w
    n_rows, w_rows = xk.shape[0], wk.shape[0]

    # ---- Per-chip VMEM budget (v5e/v6e 128 MiB, v7x 64 MiB); ~half of VMEM goes to
    # the pipelined x buffers, the rest is headroom for weight/output/misc.
    try:
        vmem_cap = int(pltpu.get_tpu_info().vmem_capacity_bytes)
    except Exception:
        vmem_cap = 64 * 1024 * 1024                        # conservative (v7x) fallback
    per_buf = max(1, vmem_cap // (2 * num_buffers))
    bytes_per_row = max(Dp, 128) * itemsize                # lane padding still costs VMEM
    tm_vmem = max(8, (per_buf // bytes_per_row) // 8 * 8)
    # TODO(synk): for extremely wide D (8 rows * D exceeding the VMEM budget) add a
    # second "arbitrary" grid axis over D with an f32 accumulator; not needed for
    # realistic EPIC dims (768).

    # ---- Row tile: fill VMEM (no default cap); keep >= 2 grid steps for v7x's two
    # TensorCores; never exceed the data (standard ragged last block, no padding).
    if n_rows <= 8:
        tile_m = n_rows                                    # single full block
    else:
        floor8 = (n_rows // 8) * 8
        if tm is not None:
            tile_m = max(8, min(_round_up(tm, 8), floor8))
        else:
            tm_split = _round_up(pl.cdiv(n_rows, 2), 8)    # feed both v7x TCs
            tile_m = max(8, min(tm_vmem, tm_split, floor8))
        if tile_m >= 128:
            tile_m = (tile_m // 128) * 128                 # unmasked lane-dense stores
    num_tiles = pl.cdiv(n_rows, tile_m)

    x_tile_bytes = tile_m * max(Dp, 128) * itemsize
    vmem_limit = int(min(max(num_buffers * x_tile_bytes + 4 * 1024 * 1024,
                             8 * 1024 * 1024),
                         int(vmem_cap * 0.9)))

    cost = pl.CostEstimate(
        flops=2 * N * D,
        transcendentals=3 * N,
        bytes_accessed=N * D * itemsize + w_rows * Dp * itemsize + N * itemsize,
    )

    x_spec_kwargs = {}
    if num_buffers != 2:
        x_spec_kwargs["pipeline_mode"] = pl.Buffered(num_buffers)
    x_spec = pl.BlockSpec((tile_m, Dp), lambda i: (i, 0), **x_spec_kwargs)

    out = pl.pallas_call(
        _epic_kernel,
        out_shape=jax.ShapeDtypeStruct((num_tiles, w_rows, tile_m), x2.dtype),
        grid_spec=pltpu.PrefetchScalarGridSpec(
            num_scalar_prefetch=0,
            grid=(num_tiles,),
            in_specs=[
                x_spec,                                               # x row tile (streamed)
                pl.BlockSpec((w_rows, Dp), lambda i: (0, 0)),         # resident weight
                pl.BlockSpec(memory_space=pltpu.MemorySpace.SMEM),    # bias scalar
            ],
            out_specs=pl.BlockSpec((1, w_rows, tile_m), lambda i: (i, 0, 0)),
        ),
        compiler_params=pltpu.CompilerParams(
            dimension_semantics=("parallel",),
            vmem_limit_bytes=vmem_limit,
        ),
        cost_estimate=cost,
    )(xk, wk, b)

    # Undo packing / tiling: out[i, j, c] -> original row (i*tile_m + c)*k + j.
    # Ragged-tail garbage lands at flat indices >= N and is sliced off (never reduced).
    out_flat = jnp.transpose(out, (0, 2, 1)).reshape(-1)[:N]
    return out_flat.reshape(*orig_shape[:-1], 1)


def _reference(x, weight, bias):
    z = x.astype(jnp.float32) @ weight.astype(jnp.float32).T + bias.astype(jnp.float32)
    sp = jnp.maximum(z, 0.0) + jnp.log1p(jnp.exp(-jnp.abs(z)))
    return jnp.log1p(sp).astype(x.dtype)


if __name__ == "__main__":
    # Case 1: module-default hidden size (dim=768) -> plain lane-wide path.
    batch, seq, dim = 2, 8, 768
    k_x, k_w, k_b = jax.random.split(jax.random.PRNGKey(0), 3)
    bound = 1.0 / (dim ** 0.5)
    x = jax.random.normal(k_x, (batch, seq, dim), dtype=jnp.float32)
    weight = jax.random.uniform(k_w, (1, dim), jnp.float32, -bound, bound)
    bias = jax.random.uniform(k_b, (1,), jnp.float32, -bound, bound)

    out = jax.block_until_ready(epic_term_importance(x, weight, bias))
    assert out.shape == (batch, seq, 1), out.shape
    assert jnp.allclose(out, _reference(x, weight, bias), atol=1e-5, rtol=1e-5), \
        "mismatch vs reference (dim=768)"

    # Case 2: narrow feature dim (dim=32) -> exercises the lane-packed path.
    batch2, seq2, dim2 = 2, 8, 32
    k_x2, k_w2, k_b2 = jax.random.split(jax.random.PRNGKey(1), 3)
    bound2 = 1.0 / (dim2 ** 0.5)
    x2 = jax.random.normal(k_x2, (batch2, seq2, dim2), dtype=jnp.float32)
    weight2 = jax.random.uniform(k_w2, (1, dim2), jnp.float32, -bound2, bound2)
    bias2 = jax.random.uniform(k_b2, (1,), jnp.float32, -bound2, bound2)

    out2 = jax.block_until_ready(epic_term_importance(x2, weight2, bias2))
    assert out2.shape == (batch2, seq2, 1), out2.shape
    assert jnp.allclose(out2, _reference(x2, weight2, bias2), atol=1e-5, rtol=1e-5), \
        "mismatch vs reference (dim=32, packed path)"

    print("KERNEL_OK")
</pallas_src>

<mosaic_0001>
module attributes {stable_mosaic.version = 11 : i64} {
  func.func @_epic_kernel(%arg0: i32, %arg1: memref<8x768xf32, #tpu.memory_space<vmem>>, %arg2: memref<1x768xf32, #tpu.memory_space<vmem>>, %arg3: memref<1xf32, #tpu.memory_space<smem>>, %arg4: memref<1x1x8xf32, #tpu.memory_space<vmem>>) attributes {dimension_semantics = [#tpu.dimension_semantics<parallel>], iteration_bounds = array<i64: 2>, scalar_prefetch = 0 : i64, scratch_operands = 0 : i64, tpu.core_type = #tpu.core_type<tc>, window_params = [{transform_indices = @transform_0, window_bounds = array<i64: 8, 768>}, {pipeline_mode = #tpu.pipeline_mode<synchronous>, transform_indices = @transform_1, window_bounds = array<i64: 1, 768>}, {transform_indices = @transform_2, window_bounds = array<i64: 1>}, {transform_indices = @transform_3, window_bounds = array<i64: 1, 1, 8>}]} {
    %c0 = arith.constant 0 : index
    %c0_0 = arith.constant 0 : index
    %0 = vector.load %arg2[%c0, %c0_0] : memref<1x768xf32, #tpu.memory_space<vmem>>, vector<1x768xf32>
    %c0_1 = arith.constant 0 : index
    %c0_2 = arith.constant 0 : index
    %1 = vector.load %arg1[%c0_1, %c0_2] : memref<8x768xf32, #tpu.memory_space<vmem>>, vector<8x768xf32>
    %cst = arith.constant dense<0.000000e+00> : vector<1x8xf32>
    %2 = tpu.matmul %0, %1, %cst {dimension_numbers = #tpu.dot_dimension_numbers<[1], [1], [0], [0], [0, 0, 1, 0], [], []>} : vector<1x768xf32>, vector<8x768xf32>, vector<1x8xf32> -> vector<1x8xf32>
    %c0_3 = arith.constant 0 : index
    %3 = memref.load %arg3[%c0_3] : memref<1xf32, #tpu.memory_space<smem>>
    %4 = vector.broadcast %3 : f32 to vector<1x8xf32>
    %5 = arith.addf %2, %4 : vector<1x8xf32>
    %cst_4 = arith.constant 0.000000e+00 : f32
    %6 = vector.broadcast %cst_4 : f32 to vector<1x8xf32>
    %7 = arith.maximumf %5, %6 : vector<1x8xf32>
    %8 = math.absf %5 : vector<1x8xf32>
    %cst_5 = arith.constant 0.000000e+00 : f32
    %9 = vector.broadcast %cst_5 : f32 to vector<1x8xf32>
    %10 = arith.subf %9, %8 : vector<1x8xf32>
    %11 = math.exp %10 : vector<1x8xf32>
    %12 = math.log1p %11 : vector<1x8xf32>
    %13 = arith.addf %7, %12 : vector<1x8xf32>
    %14 = math.log1p %13 : vector<1x8xf32>
    %c0_6 = arith.constant 0 : index
    %c0_7 = arith.constant 0 : index
    %c0_8 = arith.constant 0 : index
    %15 = vector.load %arg4[%c0_6, %c0_7, %c0_8] : memref<1x1x8xf32, #tpu.memory_space<vmem>>, vector<1x1x8xf32>
    %16 = vector.shape_cast %15 : vector<1x1x8xf32> to vector<1x8xf32>
    %17 = vector.shape_cast %14 : vector<1x8xf32> to vector<1x1x8xf32>
    tpu.vector_store %arg4[%c0_6, %c0_7, %c0_8], %17 {strides = array<i32>} : memref<1x1x8xf32, #tpu.memory_space<vmem>>, vector<1x1x8xf32>,
    return
  }
  func.func @transform_0(%arg0: i32) -> (i32, i32) {
    %c0_i32 = arith.constant 0 : i32
    %c0_i32_0 = arith.constant 0 : i32
    return %arg0, %c0_i32 : i32, i32
  }
  func.func @transform_1(%arg0: i32) -> (i32, i32) {
    %c0_i32 = arith.constant 0 : i32
    %c0_i32_0 = arith.constant 0 : i32
    %c0_i32_1 = arith.constant 0 : i32
    return %c0_i32, %c0_i32_0 : i32, i32
  }
  func.func @transform_2(%arg0: i32) -> i32 {
    %c0_i32 = arith.constant 0 : i32
    %c0_i32_0 = arith.constant 0 : i32
    return %c0_i32 : i32
  }
  func.func @transform_3(%arg0: i32) -> (i32, i32, i32) {
    %c0_i32 = arith.constant 0 : i32
    %c0_i32_0 = arith.constant 0 : i32
    %c0_i32_1 = arith.constant 0 : i32
    return %arg0, %c0_i32, %c0_i32_0 : i32, i32, i32
  }
}

</mosaic_0001>

<llo_original>
// kernel: tpu_custom_call.1
$region0: #{tpu_custom_call.1}
  #allocation0 [shape = 'u32[]', space=smem, size = 0x4, offset = 0x4, fixed_abs, tag = 'smem constant byte address 0x4 - core index']
  #allocation1 [shape = 'u32[144,128]{1,0:T(1,128)}', space=vmem, size = 0x12000, scoped, tag = 'internal scratch']
  #allocation2 [shape = 'f32[1]{0:T(128)S(6)}', space=smem, size = 0x200, scoped, tag = 'scoped memory for tpu_custom_call.1']
  %s0 = inlined_call_operand.hbm [shape: f32[16,768], index: 0, kind: input, shape index: {}]
  %s1 = inlined_call_operand.hbm [shape: f32[1,768], index: 1, kind: input, shape index: {}]
  %s2 = inlined_call_operand.<no memory space> [shape: f32[1], index: 2, kind: input, shape index: {}]
  %s3 = inlined_call_operand.hbm [shape: f32[2,1,8], index: 3, kind: output, shape index: {}]
  %s4 = sld [smem:[#allocation0]]
  $region53: #{tpu_custom_call.1} parent=0
    _
  %s6 = ssub.s32 1, %s4
  %s7 = scalar_select 0, %s6, %s4
  %8 = sst [smem:[#allocation2]] %s2
  $region1: #{tpu_custom_call.1} parent=0
    #allocation3 [shape = 'u8[49152]{0}', space=vmem, size = 0xc000, scoped, tag = 'input window, operand 0']
    #allocation4 [shape = 's32[2]{0}', space=sflag, size = 0x8, scoped, tag = 'scoped memory for tpu_custom_call.1']
    #allocation5 [shape = 's32[2]{0}', space=sflag, size = 0x8, scoped, tag = 'scoped memory for tpu_custom_call.1']
    #allocation6 [shape = 'u8[3072]{0}', space=vmem, size = 0xc00, scoped, tag = 'input window, operand 1, single buffered']
    #allocation7 [shape = 's32[1]{0}', space=sflag, size = 0x4, scoped, tag = 'scoped memory for tpu_custom_call.1']
    #allocation8 [shape = 'u8[1024]{0}', space=vmem, size = 0x400, scoped, tag = 'output window, operand 0']
    %9 = vsyncpa [#allocation4], 0
    %s10 = scalar_lea.sflag [#allocation4], 1
    %11 = vsyncpa %s10, 0
    %12 = vsyncpa [#allocation7], 0
    %13 = vsyncpa [#allocation5], 0
    %s14 = scalar_lea.sflag [#allocation5], 1
    %15 = vsyncpa %s14, 0
    loop: start=0, step=1, limit=4
    $region2: #{tpu_custom_call.1} parent=1 // loop_pre_header
      _
    $region3: #{tpu_custom_call.1} parent=1 // loop_header
      %s17 = sphi 0, %s21
      %p18 = scmp.ge.s32.totalorder %s17, 4
      %s27 = sphi 0, %s29
      %s30 = sphi 0, %s27
      %s31 = sphi 0, %s30
      %s47 = sphi 0, %s31
      %s51 = sphi 0, %s51
      %s53 = sphi 0, %s51
      %s54 = sphi 0, %s53
      %s68 = sphi 0, %s54
      %s72 = sphi 0, %s72
      %s74 = sphi 0, %s72
      %s75 = sphi 0, %s74
      %s89 = sphi 0, %s75
      %s95 = sphi 0, %s97
      %s98 = sphi 0, %s95
      %s99 = sphi 0, %s98
      %s115 = sphi 0, %s99
    $region4: #{tpu_custom_call.1} parent=1 // loop_header_branch
      %20 = sbr.rel (%p18) target = $region8
    $region5: #{tpu_custom_call.1} parent=1 // loop_body
      %s22 = ssub.s32 %s17, 1
      %s23 = ssub.s32 %s17, 2
      %s24 = sadd.s32 %s17, 1
      %s25 = ssub.s32 %s17, %s24
      %p26 = scmp.eq.s32.totalorder %s25, 0
      %s28 = sadd.s32 %s27, 1
      %s29 = scalar_select %p26, %s27, %s28
      %p32 = pneg %p26
      %p33 = scmp.eq.s32.totalorder %s17, 1
      %p34 = por %p32, %p33
      %p35 = scmp.ne.s32.totalorder %s27, %s30
      %p36 = scmp.eq.s32.totalorder %s17, 0
      %p37 = por %p35, %p36
      %p38 = scmp.ne.s32.totalorder %s27, %s30
      %p39 = scmp.eq.s32.totalorder %s22, 1
      %p40 = por %p38, %p39
      %p41 = scmp.ne.s32.totalorder %s30, %s31
      %p42 = scmp.eq.s32.totalorder %s22, 0
      %p43 = por %p41, %p42
      %p44 = scmp.ne.s32.totalorder %s30, %s31
      %p45 = scmp.eq.s32.totalorder %s23, 1
      %p46 = por %p44, %p45
      %p48 = scmp.ne.s32.totalorder %s31, %s47
      %p49 = scmp.eq.s32.totalorder %s23, 0
      %p50 = por %p48, %p49
      %s52 = sadd.s32 %s51, 1
      %p55 = scmp.eq.s32.totalorder %s17, 1
      %p56 = scmp.ne.s32.totalorder %s51, %s53
      %p57 = scmp.eq.s32.totalorder %s17, 0
      %p58 = por %p56, %p57
      %p59 = scmp.ne.s32.totalorder %s51, %s53
      %p60 = scmp.eq.s32.totalorder %s22, 1
      %p61 = por %p59, %p60
      %p62 = scmp.ne.s32.totalorder %s53, %s54
      %p63 = scmp.eq.s32.totalorder %s22, 0
      %p64 = por %p62, %p63
      %p65 = scmp.ne.s32.totalorder %s53, %s54
      %p66 = scmp.eq.s32.totalorder %s23, 1
      %p67 = por %p65, %p66
      %p69 = scmp.ne.s32.totalorder %s54, %s68
      %p70 = scmp.eq.s32.totalorder %s23, 0
      %p71 = por %p69, %p70
      %s73 = sadd.s32 %s72, 1
      %p76 = scmp.eq.s32.totalorder %s17, 1
      %p77 = scmp.ne.s32.totalorder %s72, %s74
      %p78 = scmp.eq.s32.totalorder %s17, 0
      %p79 = por %p77, %p78
      %p80 = scmp.ne.s32.totalorder %s72, %s74
      %p81 = scmp.eq.s32.totalorder %s22, 1
      %p82 = por %p80, %p81
      %p83 = scmp.ne.s32.totalorder %s74, %s75
      %p84 = scmp.eq.s32.totalorder %s22, 0
      %p85 = por %p83, %p84
      %p86 = scmp.ne.s32.totalorder %s74, %s75
      %p87 = scmp.eq.s32.totalorder %s23, 1
      %p88 = por %p86, %p87
      %p90 = scmp.ne.s32.totalorder %s75, %s89
      %p91 = scmp.eq.s32.totalorder %s23, 0
      %p92 = por %p90, %p91
      %s93 = ssub.s32 %s17, %s24
      %p94 = scmp.eq.s32.totalorder %s93, 0
      %s96 = sadd.s32 %s95, 1
      %s97 = scalar_select %p94, %s95, %s96
      %p100 = pneg %p94
      %p101 = scmp.eq.s32.totalorder %s17, 1
      %p102 = por %p100, %p101
      %p103 = scmp.ne.s32.totalorder %s95, %s98
      %p104 = scmp.eq.s32.totalorder %s17, 0
      %p105 = por %p103, %p104
      %p106 = scmp.ne.s32.totalorder %s95, %s98
      %p107 = scmp.eq.s32.totalorder %s22, 1
      %p108 = por %p106, %p107
      %p109 = scmp.ne.s32.totalorder %s98, %s99
      %p110 = scmp.eq.s32.totalorder %s22, 0
      %p111 = por %p109, %p110
      %p112 = scmp.ne.s32.totalorder %s98, %s99
      %p113 = scmp.eq.s32.totalorder %s23, 1
      %p114 = por %p112, %p113
      %p116 = scmp.ne.s32.totalorder %s99, %s115
      %p117 = scmp.eq.s32.totalorder %s23, 0
      %p118 = por %p116, %p117
      %p119 = scmp.le.s32.totalorder 1, %s17
      %p120 = scmp.lt.s32.totalorder %s17, 3
      %p121 = pnand %p119, %p120
      %p122 = pneg %p121
      // Predicated region
      $region9: #{tpu_custom_call.1} parent=5 // pred_check
        _
      $region10: #{tpu_custom_call.1} parent=5 // pred_check_branch
        %124 = sbr.rel (%p121) target = $region12
      $region11: #{tpu_custom_call.1} parent=5 // pred_region
        %s125 = ssub.s32 %s17, 1
        // Predicated region
        $region13: #{tpu_custom_call.1} parent=11 // pred_check
          %p126 = pneg %p64
        $region14: #{tpu_custom_call.1} parent=11 // pred_check_branch
          %128 = sbr.rel (%p126) target = $region16
        $region15: #{tpu_custom_call.1} parent=11 // pred_region
          %s130 = ssub.s32 96, 96
          %131 = vsyncadd [#allocation7], %s130
          %s133 = sshll.u32 [#allocation6], 4
          %s134 = int_to_ptr.vmem [resolvable:$true] %s133
          %136 = dma.hbm_to_vmem [thread:$0]  %s1, 96, %s134, [#allocation7]
        $region16: #{tpu_custom_call.1} parent=11 // pred_fallthru
          _
        // Predicated region
        $region17: #{tpu_custom_call.1} parent=11 // pred_check
          %p137 = pneg %p85
        $region18: #{tpu_custom_call.1} parent=11 // pred_check_branch
          %139 = sbr.rel (%p137) target = $region20
        $region19: #{tpu_custom_call.1} parent=11 // pred_region
          _
        $region20: #{tpu_custom_call.1} parent=11 // pred_fallthru
          _
      $region12: #{tpu_custom_call.1} parent=5 // pred_fallthru
        _
      %p140 = scmp.lt.s32.totalorder %s17, 2
      // Predicated region
      $region21: #{tpu_custom_call.1} parent=5 // pred_check
        %p141 = pneg %p140
      $region22: #{tpu_custom_call.1} parent=5 // pred_check_branch
        %143 = sbr.rel (%p141) target = $region24
      $region23: #{tpu_custom_call.1} parent=5 // pred_region
        // Predicated region
        $region25: #{tpu_custom_call.1} parent=23 // pred_check
          %p144 = pneg %p37
        $region26: #{tpu_custom_call.1} parent=23 // pred_check_branch
          %146 = sbr.rel (%p144) target = $region28
        $region27: #{tpu_custom_call.1} parent=23 // pred_region
          %s147 = sand.u32 %s27, 1
          %s148 = scalar_lea.sflag [#allocation4], %s147
          %s149 = sand.u32 %s27, 1
          %s150 = smul.addr %s149, 48
          %s151 = scalar_lea.vmem [#allocation3], %s150
          %s153 = ssub.s32 768, 768
          %154 = vsyncadd %s148, %s153
          %s155 = smul.addr %s17, 6
          %s156 = smul.addr %s155, 128
          %s157 = scalar_lea.hbm %s0, %s156
          %s159 = sshll.u32 %s151, 4
          %s160 = int_to_ptr.vmem [resolvable:$true] %s159
          %162 = dma.hbm_to_vmem [thread:$0]  %s157, 768, %s160, %s148
        $region28: #{tpu_custom_call.1} parent=23 // pred_fallthru
          _
      $region24: #{tpu_custom_call.1} parent=5 // pred_fallthru
        _
      %p163 = scmp.le.s32.totalorder 1, %s17
      %p164 = scmp.lt.s32.totalorder %s17, 3
      %p165 = pnand %p163, %p164
      %p166 = pneg %p165
      // Predicated region
      $region29: #{tpu_custom_call.1} parent=5 // pred_check
        _
      $region30: #{tpu_custom_call.1} parent=5 // pred_check_branch
        %168 = sbr.rel (%p165) target = $region32
      $region31: #{tpu_custom_call.1} parent=5 // pred_region
        %s169 = ssub.s32 %s17, 1
        %s170 = sand.u32 %s30, 1
        %s171 = scalar_lea.sflag [#allocation4], %s170
        %s172 = sand.u32 %s30, 1
        %s173 = smul.addr %s172, 48
        %s174 = scalar_lea.vmem [#allocation3], %s173
        // Predicated region
        $region33: #{tpu_custom_call.1} parent=31 // pred_check
          %p175 = pneg %p43
        $region34: #{tpu_custom_call.1} parent=31 // pred_check_branch
          %177 = sbr.rel (%p175) target = $region36
        $region35: #{tpu_custom_call.1} parent=31 // pred_region
          %178 = dma.done %s171, 768
        $region36: #{tpu_custom_call.1} parent=31 // pred_fallthru
          _
        // Predicated region
        $region37: #{tpu_custom_call.1} parent=31 // pred_check
          %p179 = pneg %p64
        $region38: #{tpu_custom_call.1} parent=31 // pred_check_branch
          %181 = sbr.rel (%p179) target = $region40
        $region39: #{tpu_custom_call.1} parent=31 // pred_region
          %182 = dma.done [#allocation7], 96
        $region40: #{tpu_custom_call.1} parent=31 // pred_fallthru
          _
        %s183 = sand.u32 %s30, 1
        %s184 = scalar_lea.sflag [#allocation4], %s183
        %s185 = sand.u32 %s30, 1
        %s186 = smul.addr %s185, 48
        %s187 = scalar_lea.vmem [#allocation3], %s186
        %p188 = pneg %p43
        %p189 = pneg %p40
        %p190 = pneg %p64
        %p191 = pneg %p61
        %p192 = pneg %p85
        %p193 = pneg %p82
        %p194 = pneg %p111
        %p195 = pneg %p108
        %s196 = sand.u32 %s98, 1
        %s197 = scalar_lea.sflag [#allocation5], %s196
        %s198 = sand.u32 %s98, 1
        %s199 = scalar_lea.vmem [#allocation8], %s198
        %v200 = vld [vmem:[#allocation6] sm:$0x3f]
        %v201 = vld [vmem:[%s174] sm:$0xff]
        %v202 = vld [vmem:[%s174 + $0x8] sm:$0xff]
        %v203 = vld [vmem:[%s174 + $0x10] sm:$0xff]
        %v204 = vld [vmem:[%s174 + $0x18] sm:$0xff]
        %v205 = vld [vmem:[%s174 + $0x20] sm:$0xff]
        %v206 = vld [vmem:[%s174 + $0x28] sm:$0xff]
        %s207 = sld [smem:[#allocation2]]
        %v208 = vstv %s207
        %v210 = vlaneseq
        %v211 = vshrl.u32 %v210, 7
        %v212 = vsub.s32 0, %v211
        %v213 = vrot.slane %v200, %v212
        %v214 = vlaneseq
        %v215 = vshrl.u32 %v214, 7
        %v216 = vsub.s32 1, %v215
        %v217 = vrot.slane %v200, %v216
        %v218 = vlaneseq
        %v219 = vshrl.u32 %v218, 7
        %v220 = vsub.s32 2, %v219
        %v221 = vrot.slane %v200, %v220
        %v222 = vlaneseq
        %v223 = vshrl.u32 %v222, 7
        %v224 = vsub.s32 3, %v223
        %v225 = vrot.slane %v200, %v224
        %v226 = vlaneseq
        %v227 = vshrl.u32 %v226, 7
        %v228 = vsub.s32 4, %v227
        %v229 = vrot.slane %v200, %v228
        %v230 = vlaneseq
        %v231 = vshrl.u32 %v230, 7
        %v232 = vsub.s32 5, %v231
        %v233 = vrot.slane %v200, %v232
        %240 = vmatprep.subr.mxu0 0.0
        %241 = vmatpush1.xpose.msra.mxu0 0.0
        %242 = vmatprep.subr.mxu0 0.0
        %243 = vmatpush1.xpose.msra.mxu0 0.0
        %244 = vmatprep.subr.mxu0 0.0
        %245 = vmatpush1.xpose.msra.mxu0 0.0
        %246 = vmatprep.subr.mxu0 0.0
        %247 = vmatpush1.xpose.msra.mxu0 0.0
        %248 = vmatprep.subr.mxu0 0.0
        %249 = vmatpush1.xpose.msra.mxu0 0.0
        %250 = vmatprep.subr.mxu0 0.0
        %251 = vmatpush1.xpose.msra.mxu0 0.0
        %252 = vmatprep.subr.mxu0 0.0
        %253 = vmatpush1.xpose.msra.mxu0 0.0
        %254 = vmatprep.subr.mxu0 0.0
        %255 = vmatpush1.xpose.msra.mxu0 0.0
        %256 = vmatprep.subr.mxu0 0.0
        %257 = vmatpush1.xpose.msra.mxu0 0.0
        %258 = vmatprep.subr.mxu0 0.0
        %259 = vmatpush1.xpose.msra.mxu0 0.0
        %260 = vmatprep.subr.mxu0 0.0
        %261 = vmatpush1.xpose.msra.mxu0 0.0
        %262 = vmatprep.subr.mxu0 0.0
        %263 = vmatpush1.xpose.msra.mxu0 0.0
        %264 = vmatprep.subr.mxu0 0.0
        %265 = vmatpush1.xpose.msra.mxu0 0.0
        %266 = vmatprep.subr.mxu0 0.0
        %267 = vmatpush1.xpose.msra.mxu0 0.0
        %268 = vmatprep.subr.mxu0 0.0
        %269 = vmatpush1.xpose.msra.mxu0 0.0
        %270 = vmatprep.subr.mxu0 %v202
        %271 = vmatpush1.xpose.msra.mxu0 %v201
        %272 = vmatprep.subr.mxu0 0.0
        %273 = vmatpush2.xpose.msra.mxu0 0.0
        %274 = vmatprep.subr.mxu0 0.0
        %275 = vmatpush2.xpose.msra.mxu0 0.0
        %276 = vmatprep.subr.mxu0 0.0
        %277 = vmatpush2.xpose.msra.mxu0 0.0
        %278 = vmatprep.subr.mxu0 0.0
        %279 = vmatpush2.xpose.msra.mxu0 0.0
        %280 = vmatprep.subr.mxu0 0.0
        %281 = vmatpush2.xpose.msra.mxu0 0.0
        %282 = vmatprep.subr.mxu0 0.0
        %283 = vmatpush2.xpose.msra.mxu0 0.0
        %284 = vmatprep.subr.mxu0 0.0
        %285 = vmatpush2.xpose.msra.mxu0 0.0
        %286 = vmatprep.subr.mxu0 0.0
        %287 = vmatpush2.xpose.msra.mxu0 0.0
        %288 = vmatprep.subr.mxu0 0.0
        %289 = vmatpush2.xpose.msra.mxu0 0.0
        %290 = vmatprep.subr.mxu0 0.0
        %291 = vmatpush2.xpose.msra.mxu0 0.0
        %292 = vmatprep.subr.mxu0 0.0
        %293 = vmatpush2.xpose.msra.mxu0 0.0
        %294 = vmatprep.subr.mxu0 0.0
        %295 = vmatpush2.xpose.msra.mxu0 0.0
        %296 = vmatprep.subr.mxu0 0.0
        %297 = vmatpush2.xpose.msra.mxu0 0.0
        %298 = vmatprep.subr.mxu0 0.0
        %299 = vmatpush2.xpose.msra.mxu0 0.0
        %300 = vmatprep.subr.mxu0 0.0
        %301 = vmatpush2.xpose.msra.mxu0 0.0
        %302 = vmatprep.subr.mxu0 0.0
        %303 = vmatpush2.xpose.msra.mxu0 0.0
        %304 = vmatprep.mubr.f32.mxu0 %v217
        %305 = vmatmul.mubr.f32.gmra.mxu0 %v213
        %v306 = vpop.f32.mrf.mxu0
        %v307 = vadd.f32 %v208, %v306
        %v308 = vpop.f32.mrf.mxu0
        %309 = vdwg.mxu0
        %310 = vmatprep.subr.mxu0 0.0
        %311 = vmatpush1.xpose.msra.mxu0 0.0
        %312 = vmatprep.subr.mxu0 0.0
        %313 = vmatpush1.xpose.msra.mxu0 0.0
        %314 = vmatprep.subr.mxu0 0.0
        %315 = vmatpush1.xpose.msra.mxu0 0.0
        %316 = vmatprep.subr.mxu0 0.0
        %317 = vmatpush1.xpose.msra.mxu0 0.0
        %318 = vmatprep.subr.mxu0 0.0
        %319 = vmatpush1.xpose.msra.mxu0 0.0
        %320 = vmatprep.subr.mxu0 0.0
        %321 = vmatpush1.xpose.msra.mxu0 0.0
        %322 = vmatprep.subr.mxu0 0.0
        %323 = vmatpush1.xpose.msra.mxu0 0.0
        %324 = vmatprep.subr.mxu0 0.0
        %325 = vmatpush1.xpose.msra.mxu0 0.0
        %326 = vmatprep.subr.mxu0 0.0
        %327 = vmatpush1.xpose.msra.mxu0 0.0
        %328 = vmatprep.subr.mxu0 0.0
        %329 = vmatpush1.xpose.msra.mxu0 0.0
        %330 = vmatprep.subr.mxu0 0.0
        %331 = vmatpush1.xpose.msra.mxu0 0.0
        %332 = vmatprep.subr.mxu0 0.0
        %333 = vmatpush1.xpose.msra.mxu0 0.0
        %334 = vmatprep.subr.mxu0 0.0
        %335 = vmatpush1.xpose.msra.mxu0 0.0
        %336 = vmatprep.subr.mxu0 0.0
        %337 = vmatpush1.xpose.msra.mxu0 0.0
        %338 = vmatprep.subr.mxu0 0.0
        %339 = vmatpush1.xpose.msra.mxu0 0.0
        %340 = vmatprep.subr.mxu0 %v204
        %341 = vmatpush1.xpose.msra.mxu0 %v203
        %342 = vmatprep.subr.mxu0 0.0
        %343 = vmatpush2.xpose.msra.mxu0 0.0
        %344 = vmatprep.subr.mxu0 0.0
        %345 = vmatpush2.xpose.msra.mxu0 0.0
        %346 = vmatprep.subr.mxu0 0.0
        %347 = vmatpush2.xpose.msra.mxu0 0.0
        %348 = vmatprep.subr.mxu0 0.0
        %349 = vmatpush2.xpose.msra.mxu0 0.0
        %350 = vmatprep.subr.mxu0 0.0
        %351 = vmatpush2.xpose.msra.mxu0 0.0
        %352 = vmatprep.subr.mxu0 0.0
        %353 = vmatpush2.xpose.msra.mxu0 0.0
        %354 = vmatprep.subr.mxu0 0.0
        %355 = vmatpush2.xpose.msra.mxu0 0.0
        %356 = vmatprep.subr.mxu0 0.0
        %357 = vmatpush2.xpose.msra.mxu0 0.0
        %358 = vmatprep.subr.mxu0 0.0
        %359 = vmatpush2.xpose.msra.mxu0 0.0
        %360 = vmatprep.subr.mxu0 0.0
        %361 = vmatpush2.xpose.msra.mxu0 0.0
        %362 = vmatprep.subr.mxu0 0.0
        %363 = vmatpush2.xpose.msra.mxu0 0.0
        %364 = vmatprep.subr.mxu0 0.0
        %365 = vmatpush2.xpose.msra.mxu0 0.0
        %366 = vmatprep.subr.mxu0 0.0
        %367 = vmatpush2.xpose.msra.mxu0 0.0
        %368 = vmatprep.subr.mxu0 0.0
        %369 = vmatpush2.xpose.msra.mxu0 0.0
        %370 = vmatprep.subr.mxu0 0.0
        %371 = vmatpush2.xpose.msra.mxu0 0.0
        %372 = vmatprep.subr.mxu0 0.0
        %373 = vmatpush2.xpose.msra.mxu0 0.0
        %374 = vmatprep.mubr.f32.mxu0 %v225
        %375 = vmatmul.mubr.f32.gmra.mxu0 %v221
        %v376 = vpop.f32.mrf.mxu0
        %v377 = vadd.f32 %v307, %v376
        %v378 = vpop.f32.mrf.mxu0
        %379 = vdwg.mxu0
        %380 = vmatprep.subr.mxu0 0.0
        %381 = vmatpush1.xpose.msra.mxu0 0.0
        %382 = vmatprep.subr.mxu0 0.0
        %383 = vmatpush1.xpose.msra.mxu0 0.0
        %384 = vmatprep.subr.mxu0 0.0
        %385 = vmatpush1.xpose.msra.mxu0 0.0
        %386 = vmatprep.subr.mxu0 0.0
        %387 = vmatpush1.xpose.msra.mxu0 0.0
        %388 = vmatprep.subr.mxu0 0.0
        %389 = vmatpush1.xpose.msra.mxu0 0.0
        %390 = vmatprep.subr.mxu0 0.0
        %391 = vmatpush1.xpose.msra.mxu0 0.0
        %392 = vmatprep.subr.mxu0 0.0
        %393 = vmatpush1.xpose.msra.mxu0 0.0
        %394 = vmatprep.subr.mxu0 0.0
        %395 = vmatpush1.xpose.msra.mxu0 0.0
        %396 = vmatprep.subr.mxu0 0.0
        %397 = vmatpush1.xpose.msra.mxu0 0.0
        %398 = vmatprep.subr.mxu0 0.0
        %399 = vmatpush1.xpose.msra.mxu0 0.0
        %400 = vmatprep.subr.mxu0 0.0
        %401 = vmatpush1.xpose.msra.mxu0 0.0
        %402 = vmatprep.subr.mxu0 0.0
        %403 = vmatpush1.xpose.msra.mxu0 0.0
        %404 = vmatprep.subr.mxu0 0.0
        %405 = vmatpush1.xpose.msra.mxu0 0.0
        %406 = vmatprep.subr.mxu0 0.0
        %407 = vmatpush1.xpose.msra.mxu0 0.0
        %408 = vmatprep.subr.mxu0 0.0
        %409 = vmatpush1.xpose.msra.mxu0 0.0
        %410 = vmatprep.subr.mxu0 %v206
        %411 = vmatpush1.xpose.msra.mxu0 %v205
        %412 = vmatprep.subr.mxu0 0.0
        %413 = vmatpush2.xpose.msra.mxu0 0.0
        %414 = vmatprep.subr.mxu0 0.0
        %415 = vmatpush2.xpose.msra.mxu0 0.0
        %416 = vmatprep.subr.mxu0 0.0
        %417 = vmatpush2.xpose.msra.mxu0 0.0
        %418 = vmatprep.subr.mxu0 0.0
        %419 = vmatpush2.xpose.msra.mxu0 0.0
        %420 = vmatprep.subr.mxu0 0.0
        %421 = vmatpush2.xpose.msra.mxu0 0.0
        %422 = vmatprep.subr.mxu0 0.0
        %423 = vmatpush2.xpose.msra.mxu0 0.0
        %424 = vmatprep.subr.mxu0 0.0
        %425 = vmatpush2.xpose.msra.mxu0 0.0
        %426 = vmatprep.subr.mxu0 0.0
        %427 = vmatpush2.xpose.msra.mxu0 0.0
        %428 = vmatprep.subr.mxu0 0.0
        %429 = vmatpush2.xpose.msra.mxu0 0.0
        %430 = vmatprep.subr.mxu0 0.0
        %431 = vmatpush2.xpose.msra.mxu0 0.0
        %432 = vmatprep.subr.mxu0 0.0
        %433 = vmatpush2.xpose.msra.mxu0 0.0
        %434 = vmatprep.subr.mxu0 0.0
        %435 = vmatpush2.xpose.msra.mxu0 0.0
        %436 = vmatprep.subr.mxu0 0.0
        %437 = vmatpush2.xpose.msra.mxu0 0.0
        %438 = vmatprep.subr.mxu0 0.0
        %439 = vmatpush2.xpose.msra.mxu0 0.0
        %440 = vmatprep.subr.mxu0 0.0
        %441 = vmatpush2.xpose.msra.mxu0 0.0
        %442 = vmatprep.subr.mxu0 0.0
        %443 = vmatpush2.xpose.msra.mxu0 0.0
        %444 = vmatprep.mubr.f32.mxu0 %v233
        %445 = vmatmul.mubr.f32.gmra.mxu0 %v229
        %v446 = vpop.f32.mrf.mxu0
        %v447 = vadd.f32 %v377, %v446
        %v448 = vpop.f32.mrf.mxu0
        %449 = vdwg.mxu0
        %v450 = vmax.f32 %v447, 0.0
        %v451 = vand.u32 2147483647, %v447
        %v452 = vsub.f32 0.0, %v451
        %v453 = vmul.f32 %v452, 1.442695
        %v454 = vpow.pop %v453
        %v455 = vadd.f32 %v454, 1.0
        %v456 = vlog2.pop %v455
        %v457 = vmul.f32 %v456, 0.6931472
        %v458 = vmul.f32 -0.5, %v454
        %v459 = vadd.f32 %v458, 1.0
        %v460 = vmul.f32 %v459, %v454
        %v461 = vand.u32 2147483647, %v454
        %vm462 = vcmp.lt.f32.partialorder %v461, 0.0004427343
        %v463 = vsel %vm462, %v460, %v457
        %v464 = vadd.f32 %v450, %v463
        %v465 = vadd.f32 %v464, 1.0
        %v466 = vlog2.pop %v465
        %v467 = vmul.f32 %v466, 0.6931472
        %v468 = vmul.f32 -0.5, %v464
        %v469 = vadd.f32 %v468, 1.0
        %v470 = vmul.f32 %v469, %v464
        %v471 = vand.u32 2147483647, %v464
        %vm472 = vcmp.lt.f32.partialorder %v471, 0.0004427343
        %v473 = vsel %vm472, %v470, %v467
        %vm474 = vcmask 57344
        %475 = vst.msk [vmem:[%s199] sm:$0x1] %vm474, %v473
        %s476 = sand.u32 %s98, 1
        %s477 = scalar_lea.sflag [#allocation5], %s476
        %s478 = sand.u32 %s98, 1
        %s479 = scalar_lea.vmem [#allocation8], %s478
        // Predicated region
        $region41: #{tpu_custom_call.1} parent=31 // pred_check
          %p480 = pneg %p108
        $region42: #{tpu_custom_call.1} parent=31 // pred_check_branch
          %482 = sbr.rel (%p480) target = $region44
        $region43: #{tpu_custom_call.1} parent=31 // pred_region
          %s484 = ssub.s32 16, 16
          %485 = vsyncadd %s477, %s484
          %s486 = smul.addr %s22, 16
          %s487 = scalar_lea.hbm %s3, %s486
          %s489 = sshll.u32 %s479, 4
          %s490 = int_to_ptr.vmem [resolvable:$true] %s489
          %492 = dma.vmem_to_hbm [thread:$0]  %s490, 16, %s487, %s477
        $region44: #{tpu_custom_call.1} parent=31 // pred_fallthru
          _
      $region32: #{tpu_custom_call.1} parent=5 // pred_fallthru
        _
      %p493 = scmp.le.s32.totalorder 2, %s17
      // Predicated region
      $region45: #{tpu_custom_call.1} parent=5 // pred_check
        %p494 = pneg %p493
      $region46: #{tpu_custom_call.1} parent=5 // pred_check_branch
        %496 = sbr.rel (%p494) target = $region48
      $region47: #{tpu_custom_call.1} parent=5 // pred_region
        %s497 = ssub.s32 %s17, 2
        // Predicated region
        $region49: #{tpu_custom_call.1} parent=47 // pred_check
          %p498 = pneg %p114
        $region50: #{tpu_custom_call.1} parent=47 // pred_check_branch
          %500 = sbr.rel (%p498) target = $region52
        $region51: #{tpu_custom_call.1} parent=47 // pred_region
          %s501 = sand.u32 %s99, 1
          %s502 = scalar_lea.sflag [#allocation5], %s501
          %s503 = sand.u32 %s99, 1
          %s504 = scalar_lea.vmem [#allocation8], %s503
          %505 = dma.done %s502, 16
        $region52: #{tpu_custom_call.1} parent=47 // pred_fallthru
          _
      $region48: #{tpu_custom_call.1} parent=5 // pred_fallthru
        _
    $region6: #{tpu_custom_call.1} parent=1 // loop_footer
      %s21 = sadd.s32 1, %s17
    $region7: #{tpu_custom_call.1} parent=1 // loop_footer_branch
      %16 = sbr.rel target = $region3
    $region8: #{tpu_custom_call.1} parent=1 // loop_exit
      _
    %506 = vsyncpa [#allocation4], 1
    %s507 = scalar_lea.sflag [#allocation4], 1
    %508 = vsyncpa %s507, 1
    %509 = vsyncpa [#allocation7], 1
    %510 = vsyncpa [#allocation5], 1
    %s511 = scalar_lea.sflag [#allocation5], 1
    %512 = vsyncpa %s511, 1

</llo_original>
